<compile_context>
chip_gen: v5e
topology: v5e:2x2
jax: 0.10.0
libtpu: 0.0.40
codegen_flags: <defaults>
</compile_context>

<pallas_src>
import math

import jax
import jax.numpy as jnp
from jax.experimental import pallas as pl
from jax.experimental.pallas import tpu as pltpu

LANE = 128
SUBLANE = 8
NEG_INF = -1e30  # masks padded softmax columns; exp underflows to exactly 0 in f32


def _round_up(n, m):
    return ((n + m - 1) // m) * m


# --------------------------- fused Pallas kernel -----------------------------

def make_fused_mlp_kernel(n_hidden, bias_offsets, bias_widths):
    """Fused forward:
         h = relu(x)                                   # F.relu(Flatten(x))
         h = relu(h @ W_i + b_i)    for i < n_hidden   # hidden Linear chain
         logits = h @ W_out + b_out                    # fc head (128-lane padded)
         out = softmax(logits, axis=-1)                # padded cols carry -1e30 bias
       Matmul operands are bf16 (MXU-native, half the weight bytes); accumulation
       and all elementwise math (relu / bias add / softmax) stay f32.
    """
    def kernel(x_ref, *rest):
        o_ref = rest[-1]
        b_ref = rest[-2]                  # (1, sum(bias_widths)) f32 bias slab
        w_refs = rest[:-2]                # pre-transposed (K, M) bf16 weights

        h = jnp.maximum(x_ref[...], 0.0)  # relu after nn.Flatten
        for i in range(n_hidden + 1):
            off, width = bias_offsets[i], bias_widths[i]
            b = b_ref[:, off:off + width]                       # static slice
            z = jnp.dot(h.astype(jnp.bfloat16), w_refs[i][...],
                        preferred_element_type=jnp.float32) + b
            if i < n_hidden:
                h = jnp.maximum(z, 0.0)                         # hidden relu
            else:
                # fc head: lane-dense softmax over the padded 128-wide output.
                m = jnp.max(z, axis=-1, keepdims=True)
                e = jnp.exp(z - m)                              # padded cols -> 0
                denom = jnp.sum(e, axis=-1, keepdims=True)
                o_ref[...] = e / denom                          # exact normalization

    return kernel


# --------------------------- wrapper ------------------------------------------

def neuralnet_forward(x, params):
    """params: dict from init_neuralnet_params.  Returns (N, output_dim) f32."""
    N = x.shape[0]
    x2 = x.reshape(N, -1).astype(jnp.float32)          # nn.Flatten
    # Pad batch to a full sublane group: clean (8,128) vreg tiles, no masked
    # partial loads/stores.  Extra zero rows are sliced away below.
    Np = _round_up(max(N, SUBLANE), SUBLANE)
    x2 = jnp.pad(x2, ((0, Np - N), (0, 0)))

    weights = params["weights"]
    out_pad = weights[-1].shape[1]                     # lane-dense padded head width
    n_hidden = len(weights) - 1

    y_pad = pl.pallas_call(
        make_fused_mlp_kernel(n_hidden, params["bias_offsets"], params["bias_widths"]),
        out_shape=jax.ShapeDtypeStruct((Np, out_pad), jnp.float32),
        in_specs=[pl.BlockSpec(memory_space=pltpu.MemorySpace.VMEM)]
                 * (1 + len(weights) + 1),
        out_specs=pl.BlockSpec(memory_space=pltpu.MemorySpace.VMEM),
    )(x2, *weights, params["bias"])

    return y_pad[:N, :params["out_dim"]]


# --------------------------- parameter init -----------------------------------

def init_neuralnet_params(key, input_dim, output_dim, n_hidden_units):
    """PyTorch nn.Linear default init: U(-1/sqrt(fan_in), 1/sqrt(fan_in)) for both
    weight and bias.  Weights are pre-transposed to (fan_in, fan_out) and stored
    bf16 (halves weight-DMA bytes; MXU-native operand dtype — f32 accumulation in
    the kernel).  The fc head is padded to 128 output lanes with zero weight
    columns and -1e30 bias entries so the softmax runs lane-dense yet exact.
    All biases are packed into one f32 slab (one DMA instead of three)."""
    def u(k, shape, fan_in):
        bound = 1.0 / math.sqrt(fan_in)
        return jax.random.uniform(k, shape, jnp.float32, -bound, bound)

    dims = [input_dim] + list(n_hidden_units) + [output_dim]
    out_pad = _round_up(output_dim, LANE)

    weights, bias_segs, bias_offsets, bias_widths = [], [], [], []
    off = 0
    for i in range(len(dims) - 1):
        key, kw, kb = jax.random.split(key, 3)
        fan_in, fan_out = dims[i], dims[i + 1]
        w = u(kw, (fan_in, fan_out), fan_in)            # (K, M), pre-transposed
        b = u(kb, (1, fan_out), fan_in)
        is_head = (i == len(dims) - 2)
        width = out_pad if is_head else fan_out         # only pad the head
        if width != fan_out:
            w = jnp.pad(w, ((0, 0), (0, width - fan_out)))
            b = jnp.pad(b, ((0, 0), (0, width - fan_out)), constant_values=NEG_INF)
        weights.append(w.astype(jnp.bfloat16))
        bias_segs.append(b)                             # stays f32
        bias_offsets.append(off)
        bias_widths.append(width)
        off += width

    bias = jnp.concatenate(bias_segs, axis=1)           # (1, total) f32 slab
    return {
        "weights": weights,
        "bias": bias,
        "bias_offsets": tuple(bias_offsets),
        "bias_widths": tuple(bias_widths),
        "out_dim": output_dim,
    }


# --------------------------- demo ----------------------------------------------

if __name__ == "__main__":
    # NeuralNet(input_dim=1024, output_dim=10, n_hidden_layers=2,
    #           n_hidden_units=[256, 128], fc=<Linear+softmax head>)
    N, C, H, W = 2, 4, 16, 16
    IN_DIM = C * H * W                      # 1024 after nn.Flatten
    OUTPUT_DIM = 10
    N_HIDDEN_UNITS = [256, 128]

    key = jax.random.PRNGKey(0)
    kx, kp = jax.random.split(key)
    x = jax.random.normal(kx, (N, C, H, W), jnp.float32)
    params = init_neuralnet_params(kp, IN_DIM, OUTPUT_DIM, N_HIDDEN_UNITS)

    y = neuralnet_forward(x, params)
    y = jax.block_until_ready(y)

    assert y.shape == (N, OUTPUT_DIM)
    assert bool(jnp.all(jnp.isfinite(y)))
    assert bool(jnp.all(y >= 0.0))
    assert bool(jnp.allclose(jnp.sum(y, axis=-1), 1.0, atol=1e-3))  # softmax rows
    print("KERNEL_OK")
</pallas_src>

<mosaic_0001>
module attributes {stable_mosaic.version = 11 : i64} {
  func.func @kernel(%arg0: memref<8x1024xf32, #tpu.memory_space<vmem>>, %arg1: memref<1024x256xbf16, #tpu.memory_space<vmem>>, %arg2: memref<256x128xbf16, #tpu.memory_space<vmem>>, %arg3: memref<128x128xbf16, #tpu.memory_space<vmem>>, %arg4: memref<1x512xf32, #tpu.memory_space<vmem>>, %arg5: memref<8x128xf32, #tpu.memory_space<vmem>>) attributes {dimension_semantics = [], scalar_prefetch = 0 : i64, scratch_operands = 0 : i64, tpu.core_type = #tpu.core_type<tc>} {
    %c0 = arith.constant 0 : index
    %c0_0 = arith.constant 0 : index
    %0 = vector.load %arg0[%c0, %c0_0] : memref<8x1024xf32, #tpu.memory_space<vmem>>, vector<8x1024xf32>
    %cst = arith.constant 0.000000e+00 : f32
    %1 = vector.broadcast %cst : f32 to vector<8x1024xf32>
    %2 = arith.maximumf %0, %1 : vector<8x1024xf32>
    %c0_1 = arith.constant 0 : index
    %c0_2 = arith.constant 0 : index
    %3 = vector.load %arg4[%c0_1, %c0_2] : memref<1x512xf32, #tpu.memory_space<vmem>>, vector<1x256xf32>
    %4 = arith.truncf %2 : vector<8x1024xf32> to vector<8x1024xbf16>
    %c0_3 = arith.constant 0 : index
    %c0_4 = arith.constant 0 : index
    %5 = vector.load %arg1[%c0_3, %c0_4] : memref<1024x256xbf16, #tpu.memory_space<vmem>>, vector<1024x256xbf16>
    %cst_5 = arith.constant dense<0.000000e+00> : vector<8x256xf32>
    %6 = tpu.matmul %4, %5, %cst_5 {dimension_numbers = #tpu.dot_dimension_numbers<[1], [0], [0], [1], [0, 0, 1, 1], [], []>} : vector<8x1024xbf16>, vector<1024x256xbf16>, vector<8x256xf32> -> vector<8x256xf32>
    %7 = vector.broadcast %3 : vector<1x256xf32> to vector<8x256xf32>
    %8 = arith.addf %6, %7 : vector<8x256xf32>
    %cst_6 = arith.constant 0.000000e+00 : f32
    %9 = vector.broadcast %cst_6 : f32 to vector<8x256xf32>
    %10 = arith.maximumf %8, %9 : vector<8x256xf32>
    %c0_7 = arith.constant 0 : index
    %c256 = arith.constant 256 : index
    %11 = vector.load %arg4[%c0_7, %c256] : memref<1x512xf32, #tpu.memory_space<vmem>>, vector<1x128xf32>
    %12 = arith.truncf %10 : vector<8x256xf32> to vector<8x256xbf16>
    %c0_8 = arith.constant 0 : index
    %c0_9 = arith.constant 0 : index
    %13 = vector.load %arg2[%c0_8, %c0_9] : memref<256x128xbf16, #tpu.memory_space<vmem>>, vector<256x128xbf16>
    %cst_10 = arith.constant dense<0.000000e+00> : vector<8x128xf32>
    %14 = tpu.matmul %12, %13, %cst_10 {dimension_numbers = #tpu.dot_dimension_numbers<[1], [0], [0], [1], [0, 0, 1, 1], [], []>} : vector<8x256xbf16>, vector<256x128xbf16>, vector<8x128xf32> -> vector<8x128xf32>
    %15 = vector.broadcast %11 : vector<1x128xf32> to vector<8x128xf32>
    %16 = arith.addf %14, %15 : vector<8x128xf32>
    %cst_11 = arith.constant 0.000000e+00 : f32
    %17 = vector.broadcast %cst_11 : f32 to vector<8x128xf32>
    %18 = arith.maximumf %16, %17 : vector<8x128xf32>
    %c0_12 = arith.constant 0 : index
    %c384 = arith.constant 384 : index
    %19 = vector.load %arg4[%c0_12, %c384] : memref<1x512xf32, #tpu.memory_space<vmem>>, vector<1x128xf32>
    %20 = arith.truncf %18 : vector<8x128xf32> to vector<8x128xbf16>
    %c0_13 = arith.constant 0 : index
    %c0_14 = arith.constant 0 : index
    %21 = vector.load %arg3[%c0_13, %c0_14] : memref<128x128xbf16, #tpu.memory_space<vmem>>, vector<128x128xbf16>
    %cst_15 = arith.constant dense<0.000000e+00> : vector<8x128xf32>
    %22 = tpu.matmul %20, %21, %cst_15 {dimension_numbers = #tpu.dot_dimension_numbers<[1], [0], [0], [1], [0, 0, 1, 1], [], []>} : vector<8x128xbf16>, vector<128x128xbf16>, vector<8x128xf32> -> vector<8x128xf32>
    %23 = vector.broadcast %19 : vector<1x128xf32> to vector<8x128xf32>
    %24 = arith.addf %22, %23 : vector<8x128xf32>
    %cst_16 = arith.constant dense<0xFF800000> : vector<8xf32>
    %25 = vector.multi_reduction <maximumf>, %24, %cst_16 [1] : vector<8x128xf32> to vector<8xf32>
    %26 = vector.shape_cast %25 : vector<8xf32> to vector<8x1xf32>
    %27 = vector.broadcast %26 : vector<8x1xf32> to vector<8x128xf32>
    %28 = arith.subf %24, %27 : vector<8x128xf32>
    %29 = math.exp %28 : vector<8x128xf32>
    %cst_17 = arith.constant dense<0.000000e+00> : vector<8xf32>
    %30 = vector.multi_reduction <add>, %29, %cst_17 [1] : vector<8x128xf32> to vector<8xf32>
    %31 = vector.shape_cast %30 : vector<8xf32> to vector<8x1xf32>
    %32 = vector.broadcast %31 : vector<8x1xf32> to vector<8x128xf32>
    %33 = arith.divf %29, %32 : vector<8x128xf32>
    %c0_18 = arith.constant 0 : index
    %c0_19 = arith.constant 0 : index
    %34 = vector.load %arg5[%c0_18, %c0_19] : memref<8x128xf32, #tpu.memory_space<vmem>>, vector<8x128xf32>
    tpu.vector_store %arg5[%c0_18, %c0_19], %33 {strides = array<i32>} : memref<8x128xf32, #tpu.memory_space<vmem>>, vector<8x128xf32>,
    return
  }
}

</mosaic_0001>

<llo_original>
// kernel: tpu_custom_call.1
$region0: #{tpu_custom_call.1}
  #allocation0 [shape = 'u32[]', space=smem, size = 0x4, offset = 0x4, fixed_abs, tag = 'smem constant byte address 0x4 - core index']
  #allocation1 [shape = 'u32[72,128]{1,0:T(1,128)}', space=vmem, size = 0x9000, scoped, tag = 'internal scratch']
  %s0 = inlined_call_operand.hbm [shape: f32[8,1024], index: 0, kind: input, shape index: {}]
  %s1 = inlined_call_operand.hbm [shape: bf16[1024,256], index: 1, kind: input, shape index: {}]
  %s2 = inlined_call_operand.hbm [shape: bf16[256,128], index: 2, kind: input, shape index: {}]
  %s3 = inlined_call_operand.hbm [shape: bf16[128,128], index: 3, kind: input, shape index: {}]
  %s4 = inlined_call_operand.hbm [shape: f32[1,512], index: 4, kind: input, shape index: {}]
  %s5 = inlined_call_operand.hbm [shape: f32[8,128], index: 5, kind: output, shape index: {}]
  %s6 = sld [smem:[#allocation0]]
  $region50: #{tpu_custom_call.1} parent=0
    _
  %s8 = ssub.s32 1, %s6
  %s9 = scalar_select 0, %s8, %s6
  $region1: #{tpu_custom_call.1} parent=0
    #allocation2 [shape = 'u8[32768]{0}', space=vmem, size = 0x8000, scoped, tag = 'input window, operand 0, single buffered']
    #allocation3 [shape = 's32[1]{0}', space=sflag, size = 0x4, scoped, tag = 'scoped memory for tpu_custom_call.1']
    #allocation4 [shape = 's32[1]{0}', space=sflag, size = 0x4, scoped, tag = 'scoped memory for tpu_custom_call.1']
    #allocation5 [shape = 'u8[524288]{0}', space=vmem, size = 0x80000, scoped, tag = 'input window, operand 1, single buffered']
    #allocation6 [shape = 's32[1]{0}', space=sflag, size = 0x4, scoped, tag = 'scoped memory for tpu_custom_call.1']
    #allocation7 [shape = 'u8[65536]{0}', space=vmem, size = 0x10000, scoped, tag = 'input window, operand 2, single buffered']
    #allocation8 [shape = 'u8[32768]{0}', space=vmem, size = 0x8000, scoped, tag = 'input window, operand 3, single buffered']
    #allocation9 [shape = 's32[1]{0}', space=sflag, size = 0x4, scoped, tag = 'scoped memory for tpu_custom_call.1']
    #allocation10 [shape = 'u8[2048]{0}', space=vmem, size = 0x800, scoped, tag = 'input window, operand 4, single buffered']
    #allocation11 [shape = 'u8[4096]{0}', space=vmem, size = 0x1000, scoped, tag = 'output window, operand 0, single buffered']
    %10 = vsyncpa [#allocation3], 0
    %11 = vsyncpa [#allocation6], 0
    %12 = vsyncpa [#allocation9], 0
    %13 = vsyncpa [#allocation4], 0
    // Predicated region
    $region2: #{tpu_custom_call.1} parent=1 // pred_check
      _
    $region3: #{tpu_custom_call.1} parent=1 // pred_check_branch
      %15 = sbr.rel (0) target = $region5
    $region4: #{tpu_custom_call.1} parent=1 // pred_region
      %17 = vsyncadd [#allocation3], 0
      %s19 = sshll.u32 %s0, 4
      %s20 = int_to_ptr.hbm [resolvable:$true] %s19
      %s21 = sshll.u32 [#allocation2], 4
      %s22 = int_to_ptr.vmem [resolvable:$true] %s21
      %24 = dma.hbm_to_vmem [thread:$0]  %s20, 1024, %s22, [#allocation3]
    $region5: #{tpu_custom_call.1} parent=1 // pred_fallthru
      _
    // Predicated region
    $region6: #{tpu_custom_call.1} parent=1 // pred_check
      _
    $region7: #{tpu_custom_call.1} parent=1 // pred_check_branch
      %26 = sbr.rel (0) target = $region9
    $region8: #{tpu_custom_call.1} parent=1 // pred_region
      %28 = vsyncadd [#allocation6], 0
      %s29 = sshll.u32 %s1, 4
      %s30 = int_to_ptr.hbm [resolvable:$true] %s29
      %s31 = sshll.u32 [#allocation5], 4
      %s32 = int_to_ptr.vmem [resolvable:$true] %s31
      %37 = dma.hbm_to_vmem [thread:$0]  %s30, 16384, %s32, [#allocation6], 128, 128, 8
    $region9: #{tpu_custom_call.1} parent=1 // pred_fallthru
      _
    // Predicated region
    $region10: #{tpu_custom_call.1} parent=1 // pred_check
      _
    $region11: #{tpu_custom_call.1} parent=1 // pred_check_branch
      %39 = sbr.rel (0) target = $region13
    $region12: #{tpu_custom_call.1} parent=1 // pred_region
      %41 = vsyncadd [#allocation6], 0
      %s42 = sshll.u32 %s2, 4
      %s43 = int_to_ptr.hbm [resolvable:$true] %s42
      %s44 = sshll.u32 [#allocation7], 4
      %s45 = int_to_ptr.vmem [resolvable:$true] %s44
      %50 = dma.hbm_to_vmem [thread:$0]  %s43, 2048, %s45, [#allocation6], 64, 64, 4
    $region13: #{tpu_custom_call.1} parent=1 // pred_fallthru
      _
    // Predicated region
    $region14: #{tpu_custom_call.1} parent=1 // pred_check
      _
    $region15: #{tpu_custom_call.1} parent=1 // pred_check_branch
      %52 = sbr.rel (0) target = $region17
    $region16: #{tpu_custom_call.1} parent=1 // pred_region
      %54 = vsyncadd [#allocation9], 0
      %s55 = sshll.u32 %s3, 4
      %s56 = int_to_ptr.hbm [resolvable:$true] %s55
      %s57 = sshll.u32 [#allocation8], 4
      %s58 = int_to_ptr.vmem [resolvable:$true] %s57
      %63 = dma.hbm_to_vmem [thread:$0]  %s56, 1024, %s58, [#allocation9], 64, 64, 4
    $region17: #{tpu_custom_call.1} parent=1 // pred_fallthru
      _
    // Predicated region
    $region18: #{tpu_custom_call.1} parent=1 // pred_check
      _
    $region19: #{tpu_custom_call.1} parent=1 // pred_check_branch
      %65 = sbr.rel (0) target = $region21
    $region20: #{tpu_custom_call.1} parent=1 // pred_region
      %67 = vsyncadd [#allocation9], 0
      %s69 = sshll.u32 %s4, 4
      %s70 = int_to_ptr.hbm [resolvable:$true] %s69
      %s71 = sshll.u32 [#allocation10], 4
      %s72 = int_to_ptr.vmem [resolvable:$true] %s71
      %74 = dma.hbm_to_vmem [thread:$0]  %s70, 64, %s72, [#allocation9]
    $region21: #{tpu_custom_call.1} parent=1 // pred_fallthru
      _
    // Predicated region
    $region22: #{tpu_custom_call.1} parent=1 // pred_check
      _
    $region23: #{tpu_custom_call.1} parent=1 // pred_check_branch
      %76 = sbr.rel (0) target = $region25
    $region24: #{tpu_custom_call.1} parent=1 // pred_region
      %78 = dma.done [#allocation3], 1024
    $region25: #{tpu_custom_call.1} parent=1 // pred_fallthru
      _
    // Predicated region
    $region26: #{tpu_custom_call.1} parent=1 // pred_check
      _
    $region27: #{tpu_custom_call.1} parent=1 // pred_check_branch
      %80 = sbr.rel (0) target = $region29
    $region28: #{tpu_custom_call.1} parent=1 // pred_region
      %82 = dma.done [#allocation6], 16384
    $region29: #{tpu_custom_call.1} parent=1 // pred_fallthru
      _
    // Predicated region
    $region30: #{tpu_custom_call.1} parent=1 // pred_check
      _
    $region31: #{tpu_custom_call.1} parent=1 // pred_check_branch
      %84 = sbr.rel (0) target = $region33
    $region32: #{tpu_custom_call.1} parent=1 // pred_region
      %86 = dma.done [#allocation6], 2048
    $region33: #{tpu_custom_call.1} parent=1 // pred_fallthru
      _
    // Predicated region
    $region34: #{tpu_custom_call.1} parent=1 // pred_check
      _
    $region35: #{tpu_custom_call.1} parent=1 // pred_check_branch
      %88 = sbr.rel (0) target = $region37
    $region36: #{tpu_custom_call.1} parent=1 // pred_region
      %90 = dma.done [#allocation9], 1024
    $region37: #{tpu_custom_call.1} parent=1 // pred_fallthru
      _
    // Predicated region
    $region38: #{tpu_custom_call.1} parent=1 // pred_check
      _
    $region39: #{tpu_custom_call.1} parent=1 // pred_check_branch
      %92 = sbr.rel (0) target = $region41
    $region40: #{tpu_custom_call.1} parent=1 // pred_region
      %94 = dma.done [#allocation9], 64
    $region41: #{tpu_custom_call.1} parent=1 // pred_fallthru
      _
    %v95 = vld [vmem:[#allocation2] sm:$0xff]
    %v96 = vld [vmem:[#allocation2 + $0x8] sm:$0xff]
    %v97 = vld [vmem:[#allocation2 + $0x10] sm:$0xff]
    %v98 = vld [vmem:[#allocation2 + $0x18] sm:$0xff]
    %v99 = vld [vmem:[#allocation2 + $0x20] sm:$0xff]
    %v100 = vld [vmem:[#allocation2 + $0x28] sm:$0xff]
    %v101 = vld [vmem:[#allocation2 + $0x30] sm:$0xff]
    %v102 = vld [vmem:[#allocation2 + $0x38] sm:$0xff]
    %v103 = vmax.f32 %v95, 0.0
    %v104 = vmax.f32 %v96, 0.0
    %v105 = vmax.f32 %v97, 0.0
    %v106 = vmax.f32 %v98, 0.0
    %v107 = vmax.f32 %v99, 0.0
    %v108 = vmax.f32 %v100, 0.0
    %v109 = vmax.f32 %v101, 0.0
    %v110 = vmax.f32 %v102, 0.0
    %v111 = vld [vmem:[#allocation10] sm:$0x3]
    %v112 = vpack.c.bf16 %v103, %v103
    %v113 = vpack.c.bf16 %v104, %v104
    %v114 = vpack.c.bf16 %v105, %v105
    %v115 = vpack.c.bf16 %v106, %v106
    %v116 = vpack.c.bf16 %v107, %v107
    %v117 = vpack.c.bf16 %v108, %v108
    %v118 = vpack.c.bf16 %v109, %v109
    %v119 = vpack.c.bf16 %v110, %v110
    %v120 = vld [vmem:[#allocation5] sm:$0xff]
    %v121 = vld [vmem:[#allocation5 + $0x8] sm:$0xff]
    %v122 = vld [vmem:[#allocation5 + $0x10] sm:$0xff]
    %v123 = vld [vmem:[#allocation5 + $0x18] sm:$0xff]
    %v124 = vld [vmem:[#allocation5 + $0x20] sm:$0xff]
    %v125 = vld [vmem:[#allocation5 + $0x28] sm:$0xff]
    %v126 = vld [vmem:[#allocation5 + $0x30] sm:$0xff]
    %v127 = vld [vmem:[#allocation5 + $0x38] sm:$0xff]
    %v128 = vld [vmem:[#allocation5 + $0x40] sm:$0xff]
    %v129 = vld [vmem:[#allocation5 + $0x48] sm:$0xff]
    %v130 = vld [vmem:[#allocation5 + $0x50] sm:$0xff]
    %v131 = vld [vmem:[#allocation5 + $0x58] sm:$0xff]
    %v132 = vld [vmem:[#allocation5 + $0x60] sm:$0xff]
    %v133 = vld [vmem:[#allocation5 + $0x68] sm:$0xff]
    %v134 = vld [vmem:[#allocation5 + $0x70] sm:$0xff]
    %v135 = vld [vmem:[#allocation5 + $0x78] sm:$0xff]
    %v136 = vld [vmem:[#allocation5 + $0x80] sm:$0xff]
    %v137 = vld [vmem:[#allocation5 + $0x88] sm:$0xff]
    %v138 = vld [vmem:[#allocation5 + $0x90] sm:$0xff]
    %v139 = vld [vmem:[#allocation5 + $0x98] sm:$0xff]
    %v140 = vld [vmem:[#allocation5 + $0xa0] sm:$0xff]
    %v141 = vld [vmem:[#allocation5 + $0xa8] sm:$0xff]
    %v142 = vld [vmem:[#allocation5 + $0xb0] sm:$0xff]
    %v143 = vld [vmem:[#allocation5 + $0xb8] sm:$0xff]
    %v144 = vld [vmem:[#allocation5 + $0xc0] sm:$0xff]
    %v145 = vld [vmem:[#allocation5 + $0xc8] sm:$0xff]
    %v146 = vld [vmem:[#allocation5 + $0xd0] sm:$0xff]
    %v147 = vld [vmem:[#allocation5 + $0xd8] sm:$0xff]
    %v148 = vld [vmem:[#allocation5 + $0xe0] sm:$0xff]
    %v149 = vld [vmem:[#allocation5 + $0xe8] sm:$0xff]
    %v150 = vld [vmem:[#allocation5 + $0xf0] sm:$0xff]
    %v151 = vld [vmem:[#allocation5 + $0xf8] sm:$0xff]
    %v152 = vld [vmem:[#allocation5 + $0x100] sm:$0xff]
    %v153 = vld [vmem:[#allocation5 + $0x108] sm:$0xff]
    %v154 = vld [vmem:[#allocation5 + $0x110] sm:$0xff]
    %v155 = vld [vmem:[#allocation5 + $0x118] sm:$0xff]
    %v156 = vld [vmem:[#allocation5 + $0x120] sm:$0xff]
    %v157 = vld [vmem:[#allocation5 + $0x128] sm:$0xff]
    %v158 = vld [vmem:[#allocation5 + $0x130] sm:$0xff]
    %v159 = vld [vmem:[#allocation5 + $0x138] sm:$0xff]
    %v160 = vld [vmem:[#allocation5 + $0x140] sm:$0xff]
    %v161 = vld [vmem:[#allocation5 + $0x148] sm:$0xff]
    %v162 = vld [vmem:[#allocation5 + $0x150] sm:$0xff]
    %v163 = vld [vmem:[#allocation5 + $0x158] sm:$0xff]
    %v164 = vld [vmem:[#allocation5 + $0x160] sm:$0xff]
    %v165 = vld [vmem:[#allocation5 + $0x168] sm:$0xff]
    %v166 = vld [vmem:[#allocation5 + $0x170] sm:$0xff]
    %v167 = vld [vmem:[#allocation5 + $0x178] sm:$0xff]
    %v168 = vld [vmem:[#allocation5 + $0x180] sm:$0xff]
    %v169 = vld [vmem:[#allocation5 + $0x188] sm:$0xff]
    %v170 = vld [vmem:[#allocation5 + $0x190] sm:$0xff]
    %v171 = vld [vmem:[#allocation5 + $0x198] sm:$0xff]
    %v172 = vld [vmem:[#allocation5 + $0x1a0] sm:$0xff]
    %v173 = vld [vmem:[#allocation5 + $0x1a8] sm:$0xff]
    %v174 = vld [vmem:[#allocation5 + $0x1b0] sm:$0xff]
    %v175 = vld [vmem:[#allocation5 + $0x1b8] sm:$0xff]
    %v176 = vld [vmem:[#allocation5 + $0x1c0] sm:$0xff]
    %v177 = vld [vmem:[#allocation5 + $0x1c8] sm:$0xff]
    %v178 = vld [vmem:[#allocation5 + $0x1d0] sm:$0xff]
    %v179 = vld [vmem:[#allocation5 + $0x1d8] sm:$0xff]
    %v180 = vld [vmem:[#allocation5 + $0x1e0] sm:$0xff]
    %v181 = vld [vmem:[#allocation5 + $0x1e8] sm:$0xff]
    %v182 = vld [vmem:[#allocation5 + $0x1f0] sm:$0xff]
    %v183 = vld [vmem:[#allocation5 + $0x1f8] sm:$0xff]
    %v184 = vld [vmem:[#allocation5 + $0x200] sm:$0xff]
    %v185 = vld [vmem:[#allocation5 + $0x208] sm:$0xff]
    %v186 = vld [vmem:[#allocation5 + $0x210] sm:$0xff]
    %v187 = vld [vmem:[#allocation5 + $0x218] sm:$0xff]
    %v188 = vld [vmem:[#allocation5 + $0x220] sm:$0xff]
    %v189 = vld [vmem:[#allocation5 + $0x228] sm:$0xff]
    %v190 = vld [vmem:[#allocation5 + $0x230] sm:$0xff]
    %v191 = vld [vmem:[#allocation5 + $0x238] sm:$0xff]
    %v192 = vld [vmem:[#allocation5 + $0x240] sm:$0xff]
    %v193 = vld [vmem:[#allocation5 + $0x248] sm:$0xff]
    %v194 = vld [vmem:[#allocation5 + $0x250] sm:$0xff]
    %v195 = vld [vmem:[#allocation5 + $0x258] sm:$0xff]
    %v196 = vld [vmem:[#allocation5 + $0x260] sm:$0xff]
    %v197 = vld [vmem:[#allocation5 + $0x268] sm:$0xff]
    %v198 = vld [vmem:[#allocation5 + $0x270] sm:$0xff]
    %v199 = vld [vmem:[#allocation5 + $0x278] sm:$0xff]
    %v200 = vld [vmem:[#allocation5 + $0x280] sm:$0xff]
    %v201 = vld [vmem:[#allocation5 + $0x288] sm:$0xff]
    %v202 = vld [vmem:[#allocation5 + $0x290] sm:$0xff]
    %v203 = vld [vmem:[#allocation5 + $0x298] sm:$0xff]
    %v204 = vld [vmem:[#allocation5 + $0x2a0] sm:$0xff]
    %v205 = vld [vmem:[#allocation5 + $0x2a8] sm:$0xff]
    %v206 = vld [vmem:[#allocation5 + $0x2b0] sm:$0xff]
    %v207 = vld [vmem:[#allocation5 + $0x2b8] sm:$0xff]
    %v208 = vld [vmem:[#allocation5 + $0x2c0] sm:$0xff]
    %v209 = vld [vmem:[#allocation5 + $0x2c8] sm:$0xff]
    %v210 = vld [vmem:[#allocation5 + $0x2d0] sm:$0xff]
    %v211 = vld [vmem:[#allocation5 + $0x2d8] sm:$0xff]
    %v212 = vld [vmem:[#allocation5 + $0x2e0] sm:$0xff]
    %v213 = vld [vmem:[#allocation5 + $0x2e8] sm:$0xff]
    %v214 = vld [vmem:[#allocation5 + $0x2f0] sm:$0xff]
    %v215 = vld [vmem:[#allocation5 + $0x2f8] sm:$0xff]
    %v216 = vld [vmem:[#allocation5 + $0x300] sm:$0xff]
    %v217 = vld [vmem:[#allocation5 + $0x308] sm:$0xff]
    %v218 = vld [vmem:[#allocation5 + $0x310] sm:$0xff]
    %v219 = vld [vmem:[#allocation5 + $0x318] sm:$0xff]
    %v220 = vld [vmem:[#allocation5 + $0x320] sm:$0xff]
    %v221 = vld [vmem:[#allocation5 + $0x328] sm:$0xff]
    %v222 = vld [vmem:[#allocation5 + $0x330] sm:$0xff]
    %v223 = vld [vmem:[#allocation5 + $0x338] sm:$0xff]
    %v224 = vld [vmem:[#allocation5 + $0x340] sm:$0xff]
    %v225 = vld [vmem:[#allocation5 + $0x348] sm:$0xff]
    %v226 = vld [vmem:[#allocation5 + $0x350] sm:$0xff]
    %v227 = vld [vmem:[#allocation5 + $0x358] sm:$0xff]
    %v228 = vld [vmem:[#allocation5 + $0x360] sm:$0xff]
    %v229 = vld [vmem:[#allocation5 + $0x368] sm:$0xff]
    %v230 = vld [vmem:[#allocation5 + $0x370] sm:$0xff]
    %v231 = vld [vmem:[#allocation5 + $0x378] sm:$0xff]
    %v232 = vld [vmem:[#allocation5 + $0x380] sm:$0xff]
    %v233 = vld [vmem:[#allocation5 + $0x388] sm:$0xff]
    %v234 = vld [vmem:[#allocation5 + $0x390] sm:$0xff]
    %v235 = vld [vmem:[#allocation5 + $0x398] sm:$0xff]
    %v236 = vld [vmem:[#allocation5 + $0x3a0] sm:$0xff]
    %v237 = vld [vmem:[#allocation5 + $0x3a8] sm:$0xff]
    %v238 = vld [vmem:[#allocation5 + $0x3b0] sm:$0xff]
    %v239 = vld [vmem:[#allocation5 + $0x3b8] sm:$0xff]
    %v240 = vld [vmem:[#allocation5 + $0x3c0] sm:$0xff]
    %v241 = vld [vmem:[#allocation5 + $0x3c8] sm:$0xff]
    %v242 = vld [vmem:[#allocation5 + $0x3d0] sm:$0xff]
    %v243 = vld [vmem:[#allocation5 + $0x3d8] sm:$0xff]
    %v244 = vld [vmem:[#allocation5 + $0x3e0] sm:$0xff]
    %v245 = vld [vmem:[#allocation5 + $0x3e8] sm:$0xff]
    %v246 = vld [vmem:[#allocation5 + $0x3f0] sm:$0xff]
    %v247 = vld [vmem:[#allocation5 + $0x3f8] sm:$0xff]
    %v249 = vperm.slane %v111, 0
    %v250 = vperm.slane %v111, 1
    %v381 = vunpack.c.l.b16 %v120
    %v382 = vunpack.c.h.b16 %v120
    %v383 = vunpack.c.l.b16 %v121
    %v384 = vunpack.c.h.b16 %v121
    %v385 = vunpack.c.l.b16 %v122
    %v386 = vunpack.c.h.b16 %v122
    %v387 = vunpack.c.l.b16 %v123
    %v388 = vunpack.c.h.b16 %v123
    %v389 = vunpack.c.l.b16 %v124
    %v390 = vunpack.c.h.b16 %v124
    %v391 = vunpack.c.l.b16 %v125
    %v392 = vunpack.c.h.b16 %v125
    %v393 = vunpack.c.l.b16 %v126
    %v394 = vunpack.c.h.b16 %v126
    %v395 = vunpack.c.l.b16 %v127
    %v396 = vunpack.c.h.b16 %v127
    %v397 = vunpack.c.l.b16 %v128
    %v398 = vunpack.c.h.b16 %v128
    %v399 = vunpack.c.l.b16 %v129
    %v400 = vunpack.c.h.b16 %v129
    %v401 = vunpack.c.l.b16 %v130
    %v402 = vunpack.c.h.b16 %v130
    %v403 = vunpack.c.l.b16 %v131
    %v404 = vunpack.c.h.b16 %v131
    %v405 = vunpack.c.l.b16 %v132
    %v406 = vunpack.c.h.b16 %v132
    %v407 = vunpack.c.l.b16 %v133
    %v408 = vunpack.c.h.b16 %v133
    %v409 = vunpack.c.l.b16 %v134
    %v410 = vunpack.c.h.b16 %v134
    %v411 = vunpack.c.l.b16 %v135
    %v412 = vunpack.c.h.b16 %v135
    %v413 = vunpack.c.l.b16 %v136
    %v414 = vunpack.c.h.b16 %v136
    %v415 = vunpack.c.l.b16 %v137
    %v416 = vunpack.c.h.b16 %v137
    %v417 = vunpack.c.l.b16 %v138
    %v418 = vunpack.c.h.b16 %v138
    %v419 = vunpack.c.l.b16 %v139
    %v420 = vunpack.c.h.b16 %v139
    %v421 = vunpack.c.l.b16 %v140
    %v422 = vunpack.c.h.b16 %v140
    %v423 = vunpack.c.l.b16 %v141
    %v424 = vunpack.c.h.b16 %v141
    %v425 = vunpack.c.l.b16 %v142
    %v426 = vunpack.c.h.b16 %v142
    %v427 = vunpack.c.l.b16 %v143
    %v428 = vunpack.c.h.b16 %v143
    %v429 = vunpack.c.l.b16 %v144
    %v430 = vunpack.c.h.b16 %v144
    %v431 = vunpack.c.l.b16 %v145
    %v432 = vunpack.c.h.b16 %v145
    %v433 = vunpack.c.l.b16 %v146
    %v434 = vunpack.c.h.b16 %v146
    %v435 = vunpack.c.l.b16 %v147
    %v436 = vunpack.c.h.b16 %v147
    %v437 = vunpack.c.l.b16 %v148
    %v438 = vunpack.c.h.b16 %v148
    %v439 = vunpack.c.l.b16 %v149
    %v440 = vunpack.c.h.b16 %v149
    %v441 = vunpack.c.l.b16 %v150
    %v442 = vunpack.c.h.b16 %v150
    %v443 = vunpack.c.l.b16 %v151
    %v444 = vunpack.c.h.b16 %v151
    %v445 = vunpack.c.l.b16 %v152
    %v446 = vunpack.c.h.b16 %v152
    %v447 = vunpack.c.l.b16 %v153
    %v448 = vunpack.c.h.b16 %v153
    %v449 = vunpack.c.l.b16 %v154
    %v450 = vunpack.c.h.b16 %v154
    %v451 = vunpack.c.l.b16 %v155
    %v452 = vunpack.c.h.b16 %v155
    %v453 = vunpack.c.l.b16 %v156
    %v454 = vunpack.c.h.b16 %v156
    %v455 = vunpack.c.l.b16 %v157
    %v456 = vunpack.c.h.b16 %v157
    %v457 = vunpack.c.l.b16 %v158
    %v458 = vunpack.c.h.b16 %v158
    %v459 = vunpack.c.l.b16 %v159
    %v460 = vunpack.c.h.b16 %v159
    %v461 = vunpack.c.l.b16 %v160
    %v462 = vunpack.c.h.b16 %v160
    %v463 = vunpack.c.l.b16 %v161
    %v464 = vunpack.c.h.b16 %v161
    %v465 = vunpack.c.l.b16 %v162
    %v466 = vunpack.c.h.b16 %v162
    %v467 = vunpack.c.l.b16 %v163
    %v468 = vunpack.c.h.b16 %v163
    %v469 = vunpack.c.l.b16 %v164
    %v470 = vunpack.c.h.b16 %v164
    %v471 = vunpack.c.l.b16 %v165
    %v472 = vunpack.c.h.b16 %v165
    %v473 = vunpack.c.l.b16 %v166
    %v474 = vunpack.c.h.b16 %v166
    %v475 = vunpack.c.l.b16 %v167
    %v476 = vunpack.c.h.b16 %v167
    %v477 = vunpack.c.l.b16 %v168
    %v478 = vunpack.c.h.b16 %v168
    %v479 = vunpack.c.l.b16 %v169
    %v480 = vunpack.c.h.b16 %v169
    %v481 = vunpack.c.l.b16 %v170
    %v482 = vunpack.c.h.b16 %v170
    %v483 = vunpack.c.l.b16 %v171
    %v484 = vunpack.c.h.b16 %v171
    %v485 = vunpack.c.l.b16 %v172
    %v486 = vunpack.c.h.b16 %v172
    %v487 = vunpack.c.l.b16 %v173
    %v488 = vunpack.c.h.b16 %v173
    %v489 = vunpack.c.l.b16 %v174
    %v490 = vunpack.c.h.b16 %v174
    %v491 = vunpack.c.l.b16 %v175
    %v492 = vunpack.c.h.b16 %v175
    %v493 = vunpack.c.l.b16 %v176
    %v494 = vunpack.c.h.b16 %v176
    %v495 = vunpack.c.l.b16 %v177
    %v496 = vunpack.c.h.b16 %v177
    %v497 = vunpack.c.l.b16 %v178
    %v498 = vunpack.c.h.b16 %v178
    %v499 = vunpack.c.l.b16 %v179
    %v500 = vunpack.c.h.b16 %v179
    %v501 = vunpack.c.l.b16 %v180
    %v502 = vunpack.c.h.b16 %v180
    %v503 = vunpack.c.l.b16 %v181
    %v504 = vunpack.c.h.b16 %v181
    %v505 = vunpack.c.l.b16 %v182
    %v506 = vunpack.c.h.b16 %v182
    %v507 = vunpack.c.l.b16 %v183
    %v508 = vunpack.c.h.b16 %v183
    %v509 = vunpack.c.l.b16 %v184
    %v510 = vunpack.c.h.b16 %v184
    %v511 = vunpack.c.l.b16 %v185
    %v512 = vunpack.c.h.b16 %v185
    %v513 = vunpack.c.l.b16 %v186
    %v514 = vunpack.c.h.b16 %v186
    %v515 = vunpack.c.l.b16 %v187
    %v516 = vunpack.c.h.b16 %v187
    %v517 = vunpack.c.l.b16 %v188
    %v518 = vunpack.c.h.b16 %v188
    %v519 = vunpack.c.l.b16 %v189
    %v520 = vunpack.c.h.b16 %v189
    %v521 = vunpack.c.l.b16 %v190
    %v522 = vunpack.c.h.b16 %v190
    %v523 = vunpack.c.l.b16 %v191
    %v524 = vunpack.c.h.b16 %v191
    %v525 = vunpack.c.l.b16 %v192
    %v526 = vunpack.c.h.b16 %v192
    %v527 = vunpack.c.l.b16 %v193
    %v528 = vunpack.c.h.b16 %v193
    %v529 = vunpack.c.l.b16 %v194
    %v530 = vunpack.c.h.b16 %v194
    %v531 = vunpack.c.l.b16 %v195
    %v532 = vunpack.c.h.b16 %v195
    %v533 = vunpack.c.l.b16 %v196
    %v534 = vunpack.c.h.b16 %v196
    %v535 = vunpack.c.l.b16 %v197
    %v536 = vunpack.c.h.b16 %v197
    %v537 = vunpack.c.l.b16 %v198
    %v538 = vunpack.c.h.b16 %v198
    %v539 = vunpack.c.l.b16 %v199
    %v540 = vunpack.c.h.b16 %v199
    %v541 = vunpack.c.l.b16 %v200
    %v542 = vunpack.c.h.b16 %v200
    %v543 = vunpack.c.l.b16 %v201
    %v544 = vunpack.c.h.b16 %v201
    %v545 = vunpack.c.l.b16 %v202
    %v546 = vunpack.c.h.b16 %v202
    %v547 = vunpack.c.l.b16 %v203
    %v548 = vunpack.c.h.b16 %v203
    %v549 = vunpack.c.l.b16 %v204
    %v550 = vunpack.c.h.b16 %v204
    %v551 = vunpack.c.l.b16 %v205
    %v552 = vunpack.c.h.b16 %v205
    %v553 = vunpack.c.l.b16 %v206
    %v554 = vunpack.c.h.b16 %v206
    %v555 = vunpack.c.l.b16 %v207
    %v556 = vunpack.c.h.b16 %v207
    %v557 = vunpack.c.l.b16 %v208
    %v558 = vunpack.c.h.b16 %v208
    %v559 = vunpack.c.l.b16 %v209
    %v560 = vunpack.c.h.b16 %v209
    %v561 = vunpack.c.l.b16 %v210
    %v562 = vunpack.c.h.b16 %v210
    %v563 = vunpack.c.l.b16 %v211
    %v564 = vunpack.c.h.b16 %v211
    %v565 = vunpack.c.l.b16 %v212
    %v566 = vunpack.c.h.b16 %v212
    %v567 = vunpack.c.l.b16 %v213
    %v568 = vunpack.c.h.b16 %v213
    %v569 = vunpack.c.l.b16 %v214
    %v570 = vunpack.c.h.b16 %v214
    %v571 = vunpack.c.l.b16 %v215
    %v572 = vunpack.c.h.b16 %v215
    %v573 = vunpack.c.l.b16 %v216
    %v574 = vunpack.c.h.b16 %v216
    %v575 = vunpack.c.l.b16 %v217
    %v576 = vunpack.c.h.b16 %v217
    %v577 = vunpack.c.l.b16 %v218
    %v578 = vunpack.c.h.b16 %v218
    %v579 = vunpack.c.l.b16 %v219
    %v580 = vunpack.c.h.b16 %v219
    %v581 = vunpack.c.l.b16 %v220
    %v582 = vunpack.c.h.b16 %v220
    %v583 = vunpack.c.l.b16 %v221
    %v584 = vunpack.c.h.b16 %v221
    %v585 = vunpack.c.l.b16 %v222
    %v586 = vunpack.c.h.b16 %v222
    %v587 = vunpack.c.l.b16 %v223
    %v588 = vunpack.c.h.b16 %v223
    %v589 = vunpack.c.l.b16 %v224
    %v590 = vunpack.c.h.b16 %v224
    %v591 = vunpack.c.l.b16 %v225
    %v592 = vunpack.c.h.b16 %v225
    %v593 = vunpack.c.l.b16 %v226
    %v594 = vunpack.c.h.b16 %v226
    %v595 = vunpack.c.l.b16 %v227
    %v596 = vunpack.c.h.b16 %v227
    %v597 = vunpack.c.l.b16 %v228
    %v598 = vunpack.c.h.b16 %v228
    %v599 = vunpack.c.l.b16 %v229
    %v600 = vunpack.c.h.b16 %v229
    %v601 = vunpack.c.l.b16 %v230
    %v602 = vunpack.c.h.b16 %v230
    %v603 = vunpack.c.l.b16 %v231
    %v604 = vunpack.c.h.b16 %v231
    %v605 = vunpack.c.l.b16 %v232
    %v606 = vunpack.c.h.b16 %v232
    %v607 = vunpack.c.l.b16 %v233
    %v608 = vunpack.c.h.b16 %v233
    %v609 = vunpack.c.l.b16 %v234
    %v610 = vunpack.c.h.b16 %v234
    %v611 = vunpack.c.l.b16 %v235
    %v612 = vunpack.c.h.b16 %v235
    %v613 = vunpack.c.l.b16 %v236
    %v614 = vunpack.c.h.b16 %v236
    %v615 = vunpack.c.l.b16 %v237
    %v616 = vunpack.c.h.b16 %v237
    %v617 = vunpack.c.l.b16 %v238
    %v618 = vunpack.c.h.b16 %v238
    %v619 = vunpack.c.l.b16 %v239
    %v620 = vunpack.c.h.b16 %v239
    %v621 = vunpack.c.l.b16 %v240
    %v622 = vunpack.c.h.b16 %v240
    %v623 = vunpack.c.l.b16 %v241
    %v624 = vunpack.c.h.b16 %v241
    %v625 = vunpack.c.l.b16 %v242
    %v626 = vunpack.c.h.b16 %v242
    %v627 = vunpack.c.l.b16 %v243
    %v628 = vunpack.c.h.b16 %v243
    %v629 = vunpack.c.l.b16 %v244
    %v630 = vunpack.c.h.b16 %v244
    %v631 = vunpack.c.l.b16 %v245
    %v632 = vunpack.c.h.b16 %v245
    %v633 = vunpack.c.l.b16 %v246
    %v634 = vunpack.c.h.b16 %v246
    %v635 = vunpack.c.l.b16 %v247
    %v636 = vunpack.c.h.b16 %v247
    %v637 = vpack.c.b16 %v383, %v381
    %v638 = vpack.c.b16 %v384, %v382
    %v639 = vpack.c.b16 %v387, %v385
    %v640 = vpack.c.b16 %v388, %v386
    %v641 = vpack.c.b16 %v391, %v389
    %v642 = vpack.c.b16 %v392, %v390
    %v643 = vpack.c.b16 %v395, %v393
    %v644 = vpack.c.b16 %v396, %v394
    %v645 = vpack.c.b16 %v399, %v397
    %v646 = vpack.c.b16 %v400, %v398
    %v647 = vpack.c.b16 %v403, %v401
    %v648 = vpack.c.b16 %v404, %v402
    %v649 = vpack.c.b16 %v407, %v405
    %v650 = vpack.c.b16 %v408, %v406
    %v651 = vpack.c.b16 %v411, %v409
    %v652 = vpack.c.b16 %v412, %v410
    %v653 = vpack.c.b16 %v415, %v413
    %v654 = vpack.c.b16 %v416, %v414
    %v655 = vpack.c.b16 %v419, %v417
    %v656 = vpack.c.b16 %v420, %v418
    %v657 = vpack.c.b16 %v423, %v421
    %v658 = vpack.c.b16 %v424, %v422
    %v659 = vpack.c.b16 %v427, %v425
    %v660 = vpack.c.b16 %v428, %v426
    %v661 = vpack.c.b16 %v431, %v429
    %v662 = vpack.c.b16 %v432, %v430
    %v663 = vpack.c.b16 %v435, %v433
    %v664 = vpack.c.b16 %v436, %v434
    %v665 = vpack.c.b16 %v439, %v437
    %v666 = vpack.c.b16 %v440, %v438
    %v667 = vpack.c.b16 %v443, %v441
    %v668 = vpack.c.b16 %v444, %v442
    %v669 = vpack.c.b16 %v447, %v445
    %v670 = vpack.c.b16 %v448, %v446
    %v671 = vpack.c.b16 %v451, %v449
    %v672 = vpack.c.b16 %v452, %v450
    %v673 = vpack.c.b16 %v455, %v453
    %v674 = vpack.c.b16 %v456, %v454
    %v675 = vpack.c.b16 %v459, %v457
    %v676 = vpack.c.b16 %v460, %v458
    %v677 = vpack.c.b16 %v463, %v461
    %v678 = vpack.c.b16 %v464, %v462
    %v679 = vpack.c.b16 %v467, %v465
    %v680 = vpack.c.b16 %v468, %v466
    %v681 = vpack.c.b16 %v471, %v469
    %v682 = vpack.c.b16 %v472, %v470
    %v683 = vpack.c.b16 %v475, %v473
    %v684 = vpack.c.b16 %v476, %v474
    %v685 = vpack.c.b16 %v479, %v477
    %v686 = vpack.c.b16 %v480, %v478
    %v687 = vpack.c.b16 %v483, %v481
    %v688 = vpack.c.b16 %v484, %v482
    %v689 = vpack.c.b16 %v487, %v485
    %v690 = vpack.c.b16 %v488, %v486
    %v691 = vpack.c.b16 %v491, %v489
    %v692 = vpack.c.b16 %v492, %v490
    %v693 = vpack.c.b16 %v495, %v493
    %v694 = vpack.c.b16 %v496, %v494
    %v695 = vpack.c.b16 %v499, %v497
    %v696 = vpack.c.b16 %v500, %v498
    %v697 = vpack.c.b16 %v503, %v501
    %v698 = vpack.c.b16 %v504, %v502
    %v699 = vpack.c.b16 %v507, %v505
    %v700 = vpack.c.b16 %v508, %v506
    %v701 = vpack.c.b16 %v511, %v509
    %v702 = vpack.c.b16 %v512, %v510
    %v703 = vpack.c.b16 %v515, %v513
    %v704 = vpack.c.b16 %v516, %v514
    %v705 = vpack.c.b16 %v519, %v517
    %v706 = vpack.c.b16 %v520, %v518
    %v707 = vpack.c.b16 %v523, %v521
    %v708 = vpack.c.b16 %v524, %v522
    %v709 = vpack.c.b16 %v527, %v525
    %v710 = vpack.c.b16 %v528, %v526
    %v711 = vpack.c.b16 %v531, %v529
    %v712 = vpack.c.b16 %v532, %v530
    %v713 = vpack.c.b16 %v535, %v533
    %v714 = vpack.c.b16 %v536, %v534
    %v715 = vpack.c.b16 %v539, %v537
    %v716 = vpack.c.b16 %v540, %v538
    %v717 = vpack.c.b16 %v543, %v541
    %v718 = vpack.c.b16 %v544, %v542
    %v719 = vpack.c.b16 %v547, %v545
    %v720 = vpack.c.b16 %v548, %v546
    %v721 = vpack.c.b16 %v551, %v549
    %v722 = vpack.c.b16 %v552, %v550
    %v723 = vpack.c.b16 %v555, %v553
    %v724 = vpack.c.b16 %v556, %v554
    %v725 = vpack.c.b16 %v559, %v557
    %v726 = vpack.c.b16 %v560, %v558
    %v727 = vpack.c.b16 %v563, %v561
    %v728 = vpack.c.b16 %v564, %v562
    %v729 = vpack.c.b16 %v567, %v565
    %v730 = vpack.c.b16 %v568, %v566
    %v731 = vpack.c.b16 %v571, %v569
    %v732 = vpack.c.b16 %v572, %v570
    %v733 = vpack.c.b16 %v575, %v573
    %v734 = vpack.c.b16 %v576, %v574
    %v735 = vpack.c.b16 %v579, %v577
    %v736 = vpack.c.b16 %v580, %v578
    %v737 = vpack.c.b16 %v583, %v581
    %v738 = vpack.c.b16 %v584, %v582
    %v739 = vpack.c.b16 %v587, %v585
    %v740 = vpack.c.b16 %v588, %v586
    %v741 = vpack.c.b16 %v591, %v589
    %v742 = vpack.c.b16 %v592, %v590
    %v743 = vpack.c.b16 %v595, %v593
    %v744 = vpack.c.b16 %v596, %v594
    %v745 = vpack.c.b16 %v599, %v597
    %v746 = vpack.c.b16 %v600, %v598
    %v747 = vpack.c.b16 %v603, %v601
    %v748 = vpack.c.b16 %v604, %v602
    %v749 = vpack.c.b16 %v607, %v605
    %v750 = vpack.c.b16 %v608, %v606
    %v751 = vpack.c.b16 %v611, %v609
    %v752 = vpack.c.b16 %v612, %v610
    %v753 = vpack.c.b16 %v615, %v613
    %v754 = vpack.c.b16 %v616, %v614
    %v755 = vpack.c.b16 %v619, %v617
    %v756 = vpack.c.b16 %v620, %v618
    %v757 = vpack.c.b16 %v623, %v621
    %v758 = vpack.c.b16 %v624, %v622
    %v759 = vpack.c.b16 %v627, %v625
    %v760 = vpack.c.b16 %v628, %v626
    %v761 = vpack.c.b16 %v631, %v629
    %v762 = vpack.c.b16 %v632, %v630
    %v763 = vpack.c.b16 %v635, %v633
    %v764 = vpack.c.b16 %v636, %v634
    %893 = vmatpush.bf16.msra.mxu0 %v651
    %894 = vmatpush.bf16.msra.mxu0 %v649
    %895 = vmatpush.bf16.msra.mxu0 %v647
    %896 = vmatpush.bf16.msra.mxu0 %v645
    %897 = vmatpush.bf16.msra.mxu0 %v643
    %898 = vmatpush.bf16.msra.mxu0 %v641
    %899 = vmatpush.bf16.msra.mxu0 %v639
    %900 = vmatpush.bf16.msra.mxu0 %v637
    %901 = vmatmul.bf16.gmra.mxu0 %v112
    %v902 = vpop.f32.mrf.mxu0
    %v903 = vadd.f32 %v249, %v902
    %v904 = vpop.f32.mrf.mxu0
    %905 = vdwg.mxu0
    %906 = vmatpush.bf16.msra.mxu0 %v667
    %907 = vmatpush.bf16.msra.mxu0 %v665
    %908 = vmatpush.bf16.msra.mxu0 %v663
    %909 = vmatpush.bf16.msra.mxu0 %v661
    %910 = vmatpush.bf16.msra.mxu0 %v659
    %911 = vmatpush.bf16.msra.mxu0 %v657
    %912 = vmatpush.bf16.msra.mxu0 %v655
    %913 = vmatpush.bf16.msra.mxu0 %v653
    %914 = vmatmul.bf16.gmra.mxu0 %v113
    %v915 = vpop.f32.mrf.mxu0
    %v916 = vadd.f32 %v903, %v915
    %v917 = vpop.f32.mrf.mxu0
    %918 = vdwg.mxu0
    %919 = vmatpush.bf16.msra.mxu0 %v683
    %920 = vmatpush.bf16.msra.mxu0 %v681
    %921 = vmatpush.bf16.msra.mxu0 %v679
    %922 = vmatpush.bf16.msra.mxu0 %v677
    %923 = vmatpush.bf16.msra.mxu0 %v675
    %924 = vmatpush.bf16.msra.mxu0 %v673
    %925 = vmatpush.bf16.msra.mxu0 %v671
    %926 = vmatpush.bf16.msra.mxu0 %v669
    %927 = vmatmul.bf16.gmra.mxu0 %v114
    %v928 = vpop.f32.mrf.mxu0
    %v929 = vadd.f32 %v916, %v928
    %v930 = vpop.f32.mrf.mxu0
    %931 = vdwg.mxu0
    %932 = vmatpush.bf16.msra.mxu0 %v699
    %933 = vmatpush.bf16.msra.mxu0 %v697
    %934 = vmatpush.bf16.msra.mxu0 %v695
    %935 = vmatpush.bf16.msra.mxu0 %v693
    %936 = vmatpush.bf16.msra.mxu0 %v691
    %937 = vmatpush.bf16.msra.mxu0 %v689
    %938 = vmatpush.bf16.msra.mxu0 %v687
    %939 = vmatpush.bf16.msra.mxu0 %v685
    %940 = vmatmul.bf16.gmra.mxu0 %v115
    %v941 = vpop.f32.mrf.mxu0
    %v942 = vadd.f32 %v929, %v941
    %v943 = vpop.f32.mrf.mxu0
    %944 = vdwg.mxu0
    %945 = vmatpush.bf16.msra.mxu0 %v715
    %946 = vmatpush.bf16.msra.mxu0 %v713
    %947 = vmatpush.bf16.msra.mxu0 %v711
    %948 = vmatpush.bf16.msra.mxu0 %v709
    %949 = vmatpush.bf16.msra.mxu0 %v707
    %950 = vmatpush.bf16.msra.mxu0 %v705
    %951 = vmatpush.bf16.msra.mxu0 %v703
    %952 = vmatpush.bf16.msra.mxu0 %v701
    %953 = vmatmul.bf16.gmra.mxu0 %v116
    %v954 = vpop.f32.mrf.mxu0
    %v955 = vadd.f32 %v942, %v954
    %v956 = vpop.f32.mrf.mxu0
    %957 = vdwg.mxu0
    %958 = vmatpush.bf16.msra.mxu0 %v731
    %959 = vmatpush.bf16.msra.mxu0 %v729
    %960 = vmatpush.bf16.msra.mxu0 %v727
    %961 = vmatpush.bf16.msra.mxu0 %v725
    %962 = vmatpush.bf16.msra.mxu0 %v723
    %963 = vmatpush.bf16.msra.mxu0 %v721
    %964 = vmatpush.bf16.msra.mxu0 %v719
    %965 = vmatpush.bf16.msra.mxu0 %v717
    %966 = vmatmul.bf16.gmra.mxu0 %v117
    %v967 = vpop.f32.mrf.mxu0
    %v968 = vadd.f32 %v955, %v967
    %v969 = vpop.f32.mrf.mxu0
    %970 = vdwg.mxu0
    %971 = vmatpush.bf16.msra.mxu0 %v747
    %972 = vmatpush.bf16.msra.mxu0 %v745
    %973 = vmatpush.bf16.msra.mxu0 %v743
    %974 = vmatpush.bf16.msra.mxu0 %v741
    %975 = vmatpush.bf16.msra.mxu0 %v739
    %976 = vmatpush.bf16.msra.mxu0 %v737
    %977 = vmatpush.bf16.msra.mxu0 %v735
    %978 = vmatpush.bf16.msra.mxu0 %v733
    %979 = vmatmul.bf16.gmra.mxu0 %v118
    %v980 = vpop.f32.mrf.mxu0
    %v981 = vadd.f32 %v968, %v980
    %v982 = vpop.f32.mrf.mxu0
    %983 = vdwg.mxu0
    %984 = vmatpush.bf16.msra.mxu0 %v763
    %985 = vmatpush.bf16.msra.mxu0 %v761
    %986 = vmatpush.bf16.msra.mxu0 %v759
    %987 = vmatpush.bf16.msra.mxu0 %v757
    %988 = vmatpush.bf16.msra.mxu0 %v755
    %989 = vmatpush.bf16.msra.mxu0 %v753
    %990 = vmatpush.bf16.msra.mxu0 %v751
    %991 = vmatpush.bf16.msra.mxu0 %v749
    %992 = vmatmul.bf16.gmra.mxu0 %v119
    %v993 = vpop.f32.mrf.mxu0
    %v994 = vadd.f32 %v981, %v993
    %v995 = vpop.f32.mrf.mxu0
    %996 = vdwg.mxu0
    %997 = vmatpush.bf16.msra.mxu0 %v652
    %998 = vmatpush.bf16.msra.mxu0 %v650
    %999 = vmatpush.bf16.msra.mxu0 %v648
    %1000 = vmatpush.bf16.msra.mxu0 %v646
    %1001 = vmatpush.bf16.msra.mxu0 %v644
    %1002 = vmatpush.bf16.msra.mxu0 %v642
    %1003 = vmatpush.bf16.msra.mxu0 %v640
    %1004 = vmatpush.bf16.msra.mxu0 %v638
    %1005 = vmatmul.bf16.gmra.mxu0 %v112
    %v1006 = vpop.f32.mrf.mxu0
    %v1007 = vadd.f32 %v250, %v1006
    %v1008 = vpop.f32.mrf.mxu0
    %1009 = vdwg.mxu0
    %1010 = vmatpush.bf16.msra.mxu0 %v668
    %1011 = vmatpush.bf16.msra.mxu0 %v666
    %1012 = vmatpush.bf16.msra.mxu0 %v664
    %1013 = vmatpush.bf16.msra.mxu0 %v662
    %1014 = vmatpush.bf16.msra.mxu0 %v660
    %1015 = vmatpush.bf16.msra.mxu0 %v658
    %1016 = vmatpush.bf16.msra.mxu0 %v656
    %1017 = vmatpush.bf16.msra.mxu0 %v654
    %1018 = vmatmul.bf16.gmra.mxu0 %v113
    %v1019 = vpop.f32.mrf.mxu0
    %v1020 = vadd.f32 %v1007, %v1019
    %v1021 = vpop.f32.mrf.mxu0
    %1022 = vdwg.mxu0
    %1023 = vmatpush.bf16.msra.mxu0 %v684
    %1024 = vmatpush.bf16.msra.mxu0 %v682
    %1025 = vmatpush.bf16.msra.mxu0 %v680
    %1026 = vmatpush.bf16.msra.mxu0 %v678
    %1027 = vmatpush.bf16.msra.mxu0 %v676
    %1028 = vmatpush.bf16.msra.mxu0 %v674
    %1029 = vmatpush.bf16.msra.mxu0 %v672
    %1030 = vmatpush.bf16.msra.mxu0 %v670
    %1031 = vmatmul.bf16.gmra.mxu0 %v114
    %v1032 = vpop.f32.mrf.mxu0
    %v1033 = vadd.f32 %v1020, %v1032
    %v1034 = vpop.f32.mrf.mxu0
    %1035 = vdwg.mxu0
    %1036 = vmatpush.bf16.msra.mxu0 %v700
    %1037 = vmatpush.bf16.msra.mxu0 %v698
    %1038 = vmatpush.bf16.msra.mxu0 %v696
    %1039 = vmatpush.bf16.msra.mxu0 %v694
    %1040 = vmatpush.bf16.msra.mxu0 %v692
    %1041 = vmatpush.bf16.msra.mxu0 %v690
    %1042 = vmatpush.bf16.msra.mxu0 %v688
    %1043 = vmatpush.bf16.msra.mxu0 %v686
    %1044 = vmatmul.bf16.gmra.mxu0 %v115
    %v1045 = vpop.f32.mrf.mxu0
    %v1046 = vadd.f32 %v1033, %v1045
    %v1047 = vpop.f32.mrf.mxu0
    %1048 = vdwg.mxu0
    %1049 = vmatpush.bf16.msra.mxu0 %v716
    %1050 = vmatpush.bf16.msra.mxu0 %v714
    %1051 = vmatpush.bf16.msra.mxu0 %v712
    %1052 = vmatpush.bf16.msra.mxu0 %v710
    %1053 = vmatpush.bf16.msra.mxu0 %v708
    %1054 = vmatpush.bf16.msra.mxu0 %v706
    %1055 = vmatpush.bf16.msra.mxu0 %v704
    %1056 = vmatpush.bf16.msra.mxu0 %v702
    %1057 = vmatmul.bf16.gmra.mxu0 %v116
    %v1058 = vpop.f32.mrf.mxu0
    %v1059 = vadd.f32 %v1046, %v1058
    %v1060 = vpop.f32.mrf.mxu0
    %1061 = vdwg.mxu0
    %1062 = vmatpush.bf16.msra.mxu0 %v732
    %1063 = vmatpush.bf16.msra.mxu0 %v730
    %1064 = vmatpush.bf16.msra.mxu0 %v728
    %1065 = vmatpush.bf16.msra.mxu0 %v726
    %1066 = vmatpush.bf16.msra.mxu0 %v724
    %1067 = vmatpush.bf16.msra.mxu0 %v722
    %1068 = vmatpush.bf16.msra.mxu0 %v720
    %1069 = vmatpush.bf16.msra.mxu0 %v718
    %1070 = vmatmul.bf16.gmra.mxu0 %v117
    %v1071 = vpop.f32.mrf.mxu0
    %v1072 = vadd.f32 %v1059, %v1071
    %v1073 = vpop.f32.mrf.mxu0
    %1074 = vdwg.mxu0
    %1075 = vmatpush.bf16.msra.mxu0 %v748
    %1076 = vmatpush.bf16.msra.mxu0 %v746
    %1077 = vmatpush.bf16.msra.mxu0 %v744
    %1078 = vmatpush.bf16.msra.mxu0 %v742
    %1079 = vmatpush.bf16.msra.mxu0 %v740
    %1080 = vmatpush.bf16.msra.mxu0 %v738
    %1081 = vmatpush.bf16.msra.mxu0 %v736
    %1082 = vmatpush.bf16.msra.mxu0 %v734
    %1083 = vmatmul.bf16.gmra.mxu0 %v118
    %v1084 = vpop.f32.mrf.mxu0
    %v1085 = vadd.f32 %v1072, %v1084
    %v1086 = vpop.f32.mrf.mxu0
    %1087 = vdwg.mxu0
    %1088 = vmatpush.bf16.msra.mxu0 %v764
    %1089 = vmatpush.bf16.msra.mxu0 %v762
    %1090 = vmatpush.bf16.msra.mxu0 %v760
    %1091 = vmatpush.bf16.msra.mxu0 %v758
    %1092 = vmatpush.bf16.msra.mxu0 %v756
    %1093 = vmatpush.bf16.msra.mxu0 %v754
    %1094 = vmatpush.bf16.msra.mxu0 %v752
    %1095 = vmatpush.bf16.msra.mxu0 %v750
    %1096 = vmatmul.bf16.gmra.mxu0 %v119
    %v1097 = vpop.f32.mrf.mxu0
    %v1098 = vadd.f32 %v1085, %v1097
    %v1099 = vpop.f32.mrf.mxu0
    %1100 = vdwg.mxu0
    %v1101 = vmax.f32 %v994, 0.0
    %v1102 = vmax.f32 %v1098, 0.0
    %v1103 = vld [vmem:[#allocation10 + $0x2] sm:$0x1]
    %v1104 = vpack.c.bf16 %v1101, %v1101
    %v1105 = vpack.c.bf16 %v1102, %v1102
    %v1106 = vld [vmem:[#allocation7] sm:$0xf]
    %v1107 = vld [vmem:[#allocation7 + $0x4] sm:$0xf]
    %v1108 = vld [vmem:[#allocation7 + $0x8] sm:$0xf]
    %v1109 = vld [vmem:[#allocation7 + $0xc] sm:$0xf]
    %v1110 = vld [vmem:[#allocation7 + $0x10] sm:$0xf]
    %v1111 = vld [vmem:[#allocation7 + $0x14] sm:$0xf]
    %v1112 = vld [vmem:[#allocation7 + $0x18] sm:$0xf]
    %v1113 = vld [vmem:[#allocation7 + $0x1c] sm:$0xf]
    %v1114 = vld [vmem:[#allocation7 + $0x20] sm:$0xf]
    %v1115 = vld [vmem:[#allocation7 + $0x24] sm:$0xf]
    %v1116 = vld [vmem:[#allocation7 + $0x28] sm:$0xf]
    %v1117 = vld [vmem:[#allocation7 + $0x2c] sm:$0xf]
    %v1118 = vld [vmem:[#allocation7 + $0x30] sm:$0xf]
    %v1119 = vld [vmem:[#allocation7 + $0x34] sm:$0xf]
    %v1120 = vld [vmem:[#allocation7 + $0x38] sm:$0xf]
    %v1121 = vld [vmem:[#allocation7 + $0x3c] sm:$0xf]
    %v1122 = vld [vmem:[#allocation7 + $0x40] sm:$0xf]
    %v1123 = vld [vmem:[#allocation7 + $0x44] sm:$0xf]
    %v1124 = vld [vmem:[#allocation7 + $0x48] sm:$0xf]
    %v1125 = vld [vmem:[#allocation7 + $0x4c] sm:$0xf]
    %v1126 = vld [vmem:[#allocation7 + $0x50] sm:$0xf]
    %v1127 = vld [vmem:[#allocation7 + $0x54] sm:$0xf]
    %v1128 = vld [vmem:[#allocation7 + $0x58] sm:$0xf]
    %v1129 = vld [vmem:[#allocation7 + $0x5c] sm:$0xf]
    %v1130 = vld [vmem:[#allocation7 + $0x60] sm:$0xf]
    %v1131 = vld [vmem:[#allocation7 + $0x64] sm:$0xf]
    %v1132 = vld [vmem:[#allocation7 + $0x68] sm:$0xf]
    %v1133 = vld [vmem:[#allocation7 + $0x6c] sm:$0xf]
    %v1134 = vld [vmem:[#allocation7 + $0x70] sm:$0xf]
    %v1135 = vld [vmem:[#allocation7 + $0x74] sm:$0xf]
    %v1136 = vld [vmem:[#allocation7 + $0x78] sm:$0xf]
    %v1137 = vld [vmem:[#allocation7 + $0x7c] sm:$0xf]
    %v1139 = vperm.slane %v1103, 0
    %v1173 = vunpack.c.l.b16 %v1106
    %v1174 = vunpack.c.l.b16 %v1107
    %v1175 = vunpack.c.l.b16 %v1108
    %v1176 = vunpack.c.l.b16 %v1109
    %v1177 = vunpack.c.l.b16 %v1110
    %v1178 = vunpack.c.l.b16 %v1111
    %v1179 = vunpack.c.l.b16 %v1112
    %v1180 = vunpack.c.l.b16 %v1113
    %v1181 = vunpack.c.l.b16 %v1114
    %v1182 = vunpack.c.l.b16 %v1115
    %v1183 = vunpack.c.l.b16 %v1116
    %v1184 = vunpack.c.l.b16 %v1117
    %v1185 = vunpack.c.l.b16 %v1118
    %v1186 = vunpack.c.l.b16 %v1119
    %v1187 = vunpack.c.l.b16 %v1120
    %v1188 = vunpack.c.l.b16 %v1121
    %v1189 = vunpack.c.l.b16 %v1122
    %v1190 = vunpack.c.l.b16 %v1123
    %v1191 = vunpack.c.l.b16 %v1124
    %v1192 = vunpack.c.l.b16 %v1125
    %v1193 = vunpack.c.l.b16 %v1126
    %v1194 = vunpack.c.l.b16 %v1127
    %v1195 = vunpack.c.l.b16 %v1128
    %v1196 = vunpack.c.l.b16 %v1129
    %v1197 = vunpack.c.l.b16 %v1130
    %v1198 = vunpack.c.l.b16 %v1131
    %v1199 = vunpack.c.l.b16 %v1132
    %v1200 = vunpack.c.l.b16 %v1133
    %v1201 = vunpack.c.l.b16 %v1134
    %v1202 = vunpack.c.l.b16 %v1135
    %v1203 = vunpack.c.l.b16 %v1136
    %v1204 = vunpack.c.l.b16 %v1137
    %v1205 = vpack.c.b16 %v1174, %v1173
    %v1206 = vpack.c.b16 %v1176, %v1175
    %v1207 = vpack.c.b16 %v1178, %v1177
    %v1208 = vpack.c.b16 %v1180, %v1179
    %v1209 = vpack.c.b16 %v1182, %v1181
    %v1210 = vpack.c.b16 %v1184, %v1183
    %v1211 = vpack.c.b16 %v1186, %v1185
    %v1212 = vpack.c.b16 %v1188, %v1187
    %v1213 = vpack.c.b16 %v1190, %v1189
    %v1214 = vpack.c.b16 %v1192, %v1191
    %v1215 = vpack.c.b16 %v1194, %v1193
    %v1216 = vpack.c.b16 %v1196, %v1195
    %v1217 = vpack.c.b16 %v1198, %v1197
    %v1218 = vpack.c.b16 %v1200, %v1199
    %v1219 = vpack.c.b16 %v1202, %v1201
    %v1220 = vpack.c.b16 %v1204, %v1203
    %1237 = vmatpush.bf16.msra.mxu0 %v1212
    %1238 = vmatpush.bf16.msra.mxu0 %v1211
    %1239 = vmatpush.bf16.msra.mxu0 %v1210
    %1240 = vmatpush.bf16.msra.mxu0 %v1209
    %1241 = vmatpush.bf16.msra.mxu0 %v1208
    %1242 = vmatpush.bf16.msra.mxu0 %v1207
    %1243 = vmatpush.bf16.msra.mxu0 %v1206
    %1244 = vmatpush.bf16.msra.mxu0 %v1205
    %1245 = vmatmul.bf16.gmra.mxu0 %v1104
    %v1246 = vpop.f32.mrf.mxu0
    %v1247 = vadd.f32 %v1139, %v1246
    %v1248 = vpop.f32.mrf.mxu0
    %1249 = vdwg.mxu0
    %1250 = vmatpush.bf16.msra.mxu0 %v1220
    %1251 = vmatpush.bf16.msra.mxu0 %v1219
    %1252 = vmatpush.bf16.msra.mxu0 %v1218
    %1253 = vmatpush.bf16.msra.mxu0 %v1217
    %1254 = vmatpush.bf16.msra.mxu0 %v1216
    %1255 = vmatpush.bf16.msra.mxu0 %v1215
    %1256 = vmatpush.bf16.msra.mxu0 %v1214
    %1257 = vmatpush.bf16.msra.mxu0 %v1213
    %1258 = vmatmul.bf16.gmra.mxu0 %v1105
    %v1259 = vpop.f32.mrf.mxu0
    %v1260 = vadd.f32 %v1247, %v1259
    %v1261 = vpop.f32.mrf.mxu0
    %1262 = vdwg.mxu0
    %v1263 = vmax.f32 %v1260, 0.0
    %v1264 = vld [vmem:[#allocation10 + $0x3] sm:$0x1]
    %v1265 = vpack.c.bf16 %v1263, %v1263
    %v1266 = vld [vmem:[#allocation8] sm:$0xf]
    %v1267 = vld [vmem:[#allocation8 + $0x4] sm:$0xf]
    %v1268 = vld [vmem:[#allocation8 + $0x8] sm:$0xf]
    %v1269 = vld [vmem:[#allocation8 + $0xc] sm:$0xf]
    %v1270 = vld [vmem:[#allocation8 + $0x10] sm:$0xf]
    %v1271 = vld [vmem:[#allocation8 + $0x14] sm:$0xf]
    %v1272 = vld [vmem:[#allocation8 + $0x18] sm:$0xf]
    %v1273 = vld [vmem:[#allocation8 + $0x1c] sm:$0xf]
    %v1274 = vld [vmem:[#allocation8 + $0x20] sm:$0xf]
    %v1275 = vld [vmem:[#allocation8 + $0x24] sm:$0xf]
    %v1276 = vld [vmem:[#allocation8 + $0x28] sm:$0xf]
    %v1277 = vld [vmem:[#allocation8 + $0x2c] sm:$0xf]
    %v1278 = vld [vmem:[#allocation8 + $0x30] sm:$0xf]
    %v1279 = vld [vmem:[#allocation8 + $0x34] sm:$0xf]
    %v1280 = vld [vmem:[#allocation8 + $0x38] sm:$0xf]
    %v1281 = vld [vmem:[#allocation8 + $0x3c] sm:$0xf]
    %v1283 = vperm.slane %v1264, 0
    %v1301 = vunpack.c.l.b16 %v1266
    %v1302 = vunpack.c.l.b16 %v1267
    %v1303 = vunpack.c.l.b16 %v1268
    %v1304 = vunpack.c.l.b16 %v1269
    %v1305 = vunpack.c.l.b16 %v1270
    %v1306 = vunpack.c.l.b16 %v1271
    %v1307 = vunpack.c.l.b16 %v1272
    %v1308 = vunpack.c.l.b16 %v1273
    %v1309 = vunpack.c.l.b16 %v1274
    %v1310 = vunpack.c.l.b16 %v1275
    %v1311 = vunpack.c.l.b16 %v1276
    %v1312 = vunpack.c.l.b16 %v1277
    %v1313 = vunpack.c.l.b16 %v1278
    %v1314 = vunpack.c.l.b16 %v1279
    %v1315 = vunpack.c.l.b16 %v1280
    %v1316 = vunpack.c.l.b16 %v1281
    %v1317 = vpack.c.b16 %v1302, %v1301
    %v1318 = vpack.c.b16 %v1304, %v1303
    %v1319 = vpack.c.b16 %v1306, %v1305
    %v1320 = vpack.c.b16 %v1308, %v1307
    %v1321 = vpack.c.b16 %v1310, %v1309
    %v1322 = vpack.c.b16 %v1312, %v1311
    %v1323 = vpack.c.b16 %v1314, %v1313
    %v1324 = vpack.c.b16 %v1316, %v1315
    %1333 = vmatpush.bf16.msra.mxu0 %v1324
    %1334 = vmatpush.bf16.msra.mxu0 %v1323
    %1335 = vmatpush.bf16.msra.mxu0 %v1322
    %1336 = vmatpush.bf16.msra.mxu0 %v1321
    %1337 = vmatpush.bf16.msra.mxu0 %v1320
    %1338 = vmatpush.bf16.msra.mxu0 %v1319
    %1339 = vmatpush.bf16.msra.mxu0 %v1318
    %1340 = vmatpush.bf16.msra.mxu0 %v1317
    %1341 = vmatmul.bf16.gmra.mxu0 %v1265
    %v1342 = vpop.f32.mrf.mxu0
    %v1343 = vadd.f32 %v1283, %v1342
    %v1344 = vpop.f32.mrf.mxu0
    %1345 = vdwg.mxu0
    %1346 = vmax.xlane.f32.xlu0 %v1343
    %v1347 = vpop.xlane.xlu0 %1346
    %v1348 = vsub.f32 %v1343, %v1347
    %v1349 = vmul.f32 %v1348, 1.442695
    %v1350 = vpow.pop %v1349
    %1351 = vadd.xlane.f32.xlu0 %v1350
    %v1352 = vpop.xlane.xlu0 %1351
    %v1353 = vrcp.pop %v1352
    %v1354 = vmul.f32 %v1352, %v1353
    %v1355 = vsub.f32 1.0, %v1354
    %v1356 = vmul.f32 %v1353, %v1355
    %v1357 = vadd.f32 %v1353, %v1356
    %vm1358 = vweird.f32 %v1352
    %vm1359 = vweird.f32 %v1353
    %vm1360 = vmor %vm1358, %vm1359
    %v1361 = vsel %vm1360, %v1353, %v1357
    %v1362 = vand.u32 2147483647, %v1352
    %vm1363 = vcmp.eq.f32.partialorder %v1362, 8.507059e+37
    %v1364 = vand.u32 %v1352, 2147483648
    %v1365 = vor.u32 1.1754944e-38, %v1364
    %v1366 = vsel %vm1363, %v1365, %v1361
    %v1367 = vmul.f32 %v1350, %v1366
    %1368 = vst [vmem:[#allocation11] sm:$0xff] %v1367
    // Predicated region
    $region42: #{tpu_custom_call.1} parent=1 // pred_check
      _
    $region43: #{tpu_custom_call.1} parent=1 // pred_check_branch
      %1370 = sbr.rel (0) target = $region45
    $region44: #{tpu_custom_call.1} parent=1 // pred_region
      %1372 = vsyncadd [#allocation4], 0
      %s1374 = sshll.u32 [#allocation11], 4
      %s1375 = int_to_ptr.vmem [resolvable:$true] %s1374
      %s1376 = sshll.u32 %s5, 4
      %s1377 = int_to_ptr.hbm [resolvable:$true] %s1376
      %1379 = dma.vmem_to_hbm [thread:$0]  %s1375, 128, %s1377, [#allocation4]
    $region45: #{tpu_custom_call.1} parent=1 // pred_fallthru
      _
    // Predicated region
    $region46: #{tpu_custom_call.1} parent=1 // pred_check
      _
    $region47: #{tpu_custom_call.1} parent=1 // pred_check_branch
      %1381 = sbr.rel (0) target = $region49
    $region48: #{tpu_custom_call.1} parent=1 // pred_region
      %1383 = dma.done [#allocation4], 128
    $region49: #{tpu_custom_call.1} parent=1 // pred_fallthru
      _
    %1384 = vsyncpa [#allocation3], 1
    %1385 = vsyncpa [#allocation6], 1
    %1386 = vsyncpa [#allocation9], 1
    %1387 = vsyncpa [#allocation4], 1

</llo_original>
